<compile_context>
chip_gen: v7x
topology: tpu7x:2x2x1
jax: 0.10.0
libtpu: 0.0.40
codegen_flags: <defaults>
</compile_context>

<pallas_src>
import functools
import math

import jax
import jax.numpy as jnp
from jax import lax
from jax.experimental import pallas as pl
from jax.experimental.pallas import tpu as pltpu

_LANES_MAX = 1024       # lane-dense last dim, multiple of 128
_MAX_ROW_TILE = 1024    # rows per grid step -> (1024, 1024) f32 tile = 4 MiB
_VMEM_LIMIT = 32 * 1024 * 1024  # explicit scoped-VMEM budget (safe on v5e/v6e/v7x)


def _fn(x):
    # stand-in for the user-supplied `fn` (augmentation branch): elementwise.
    return x * 2.0 + 1.0


def _fn_else(x):
    # default `fn_else = lambda x: x`
    return x


def _round_up(a, b):
    return ((a + b - 1) // b) * b


def _fn_kernel(x_ref, o_ref):
    """Elementwise `fn` on one lane-dense (row_tile, lanes) VMEM tile."""
    o_ref[...] = x_ref[...] * 2.0 + 1.0


def _elementwise_call(x2d, rows, lanes, row_tile):
    """Tiled, double-buffered pallas_call over a (rows, lanes) slab."""
    return pl.pallas_call(
        _fn_kernel,
        out_shape=jax.ShapeDtypeStruct((rows, lanes), x2d.dtype),
        grid_spec=pltpu.PrefetchScalarGridSpec(
            num_scalar_prefetch=0,
            grid=(rows // row_tile,),
            in_specs=[pl.BlockSpec((row_tile, lanes), lambda i: (i, 0))],
            out_specs=pl.BlockSpec((row_tile, lanes), lambda i: (i, 0)),
        ),
        # No input_output_aliases: aliasing a non-donated jit parameter would
        # force a hidden defensive copy (review item 2).
        compiler_params=pltpu.CompilerParams(
            dimension_semantics=("parallel",),
            vmem_limit_bytes=_VMEM_LIMIT,
        ),
    )(x2d)


def _choose_exact_layout(n):
    """Pick (rows, lanes, row_tile) that exactly factor n (no pad, no slice).

    Returns None if no clean factorization exists; caller falls back to the
    padded path.  All of this runs at trace time on static shapes.
    """
    if n % 128 != 0:
        return None
    # lanes: largest multiple of 128 (<= _LANES_MAX) dividing n.
    lanes = 128
    for k in (8, 4, 2):
        if n % (k * 128) == 0:
            lanes = k * 128
            break
    rows = n // lanes
    if rows <= _MAX_ROW_TILE:
        # Small/medium input: prefer 2 grid steps (sublane-aligned halves) so
        # the parallel axis can shard across both TCs on v7x; otherwise a
        # single full-extent block.
        if rows % 16 == 0 and rows >= 16:
            return rows, lanes, rows // 2
        return rows, lanes, rows
    # Large input: largest divisor of rows that is a multiple of 8 and fits
    # the max tile.  Candidate scan is <= 128 Python-level checks.
    for d in range(_MAX_ROW_TILE, 7, -8):
        if rows % d == 0:
            return rows, lanes, d
    return None


def _apply_fn_pallas(x):
    """fn(x) via a tiled, pipelined Pallas kernel (only runs on the fn path)."""
    orig_shape = x.shape
    n = math.prod(orig_shape)

    layout = _choose_exact_layout(n)
    if layout is not None:
        # Fast path: reshape is a pure bitcast; zero extra HBM traffic.
        rows, lanes, row_tile = layout
        x2d = x.reshape(rows, lanes)
        out2d = _elementwise_call(x2d, rows, lanes, row_tile)
        return out2d.reshape(orig_shape)

    # Ragged fallback: pad up to a tileable slab, slice the result back.
    # TODO(synk): a masked tail store inside the kernel would avoid this extra
    # copy for ragged sizes, but ragged activations are rare in StyleGAN2.
    lanes = min(_LANES_MAX, max(128, _round_up(-(-n // 8), 128)))
    rows = -(-n // lanes)
    if rows <= _MAX_ROW_TILE:
        row_tile = _round_up(rows, 8)
    else:
        row_tile = _MAX_ROW_TILE
    rows_p = _round_up(rows, row_tile)
    n_pad = rows_p * lanes

    flat = x.reshape(-1)
    if n_pad != n:
        flat = jnp.pad(flat, (0, n_pad - n))
    x2d = flat.reshape(rows_p, lanes)
    out2d = _elementwise_call(x2d, rows_p, lanes, row_tile)
    return out2d.reshape(-1)[:n].reshape(orig_shape)


@functools.partial(jax.jit, static_argnames=("prob",))
def random_apply(x, key, prob):
    """RandomApply.forward(x).

    x    : float array (e.g. NCHW activations)
    key  : jax PRNG key standing in for Python's host-side random()
    prob : probability of applying `fn`
    """
    u = jax.random.uniform(key, (), dtype=jnp.float32)
    apply_fn = u < prob
    # Branch hoisted out of the kernel: the fn_else (identity) path pays zero
    # HBM traffic and no kernel launch.
    return lax.cond(apply_fn, _apply_fn_pallas, _fn_else, x)


if __name__ == "__main__":
    key = jax.random.PRNGKey(0)
    kx, kcoin = jax.random.split(key)

    B, C, H, W = 2, 4, 16, 16
    x = jax.random.normal(kx, (B, C, H, W), dtype=jnp.float32)

    # Force the fn path (prob=1.0) so the Pallas kernel is guaranteed to run.
    out_fn = jax.block_until_ready(random_apply(x, kcoin, 1.0))
    assert out_fn.shape == x.shape and out_fn.dtype == x.dtype
    assert jnp.allclose(out_fn, _fn(x), atol=1e-6), "fn path mismatch"

    # Force the fn_else path (prob=0.0): kernel is skipped entirely.
    out_else = jax.block_until_ready(random_apply(x, kcoin, 0.0))
    assert jnp.allclose(out_else, x, atol=1e-6), "fn_else path mismatch"

    # Actual module semantics: coin flip with prob=0.5.
    prob = 0.5
    out = jax.block_until_ready(random_apply(x, kcoin, prob))
    u = jax.random.uniform(kcoin, (), dtype=jnp.float32)
    ref = jnp.where(u < prob, _fn(x), _fn_else(x))
    assert out.shape == x.shape and out.dtype == x.dtype
    assert jnp.allclose(out, ref, atol=1e-6), "mismatch vs reference"

    # Exercise the ragged (padded) fallback path with a non-128-multiple size.
    xr = jax.random.normal(kx, (3, 5, 7), dtype=jnp.float32)
    out_r = jax.block_until_ready(random_apply(xr, kcoin, 1.0))
    assert jnp.allclose(out_r, _fn(xr), atol=1e-6), "ragged path mismatch"

    print("KERNEL_OK")
</pallas_src>

<mosaic_0001>
module attributes {stable_mosaic.version = 11 : i64} {
  func.func @_fn_kernel(%arg0: i32, %arg1: memref<2x1024xf32, #tpu.memory_space<vmem>>, %arg2: memref<2x1024xf32, #tpu.memory_space<vmem>>) attributes {dimension_semantics = [#tpu.dimension_semantics<parallel>], iteration_bounds = array<i64: 1>, scalar_prefetch = 0 : i64, scratch_operands = 0 : i64, tpu.core_type = #tpu.core_type<tc>, window_params = [{transform_indices = @transform_0, window_bounds = array<i64: 2, 1024>}, {transform_indices = @transform_1, window_bounds = array<i64: 2, 1024>}]} {
    %c0 = arith.constant 0 : index
    %c0_0 = arith.constant 0 : index
    %0 = vector.load %arg1[%c0, %c0_0] : memref<2x1024xf32, #tpu.memory_space<vmem>>, vector<2x1024xf32>
    %cst = arith.constant 2.000000e+00 : f32
    %1 = vector.broadcast %cst : f32 to vector<2x1024xf32>
    %2 = arith.mulf %0, %1 : vector<2x1024xf32>
    %cst_1 = arith.constant 1.000000e+00 : f32
    %3 = vector.broadcast %cst_1 : f32 to vector<2x1024xf32>
    %4 = arith.addf %2, %3 : vector<2x1024xf32>
    %c0_2 = arith.constant 0 : index
    %c0_3 = arith.constant 0 : index
    %5 = vector.load %arg2[%c0_2, %c0_3] : memref<2x1024xf32, #tpu.memory_space<vmem>>, vector<2x1024xf32>
    tpu.vector_store %arg2[%c0_2, %c0_3], %4 {strides = array<i32>} : memref<2x1024xf32, #tpu.memory_space<vmem>>, vector<2x1024xf32>,
    return
  }
  func.func @transform_0(%arg0: i32) -> (i32, i32) {
    %c0_i32 = arith.constant 0 : i32
    %c0_i32_0 = arith.constant 0 : i32
    return %arg0, %c0_i32 : i32, i32
  }
  func.func @transform_1(%arg0: i32) -> (i32, i32) {
    %c0_i32 = arith.constant 0 : i32
    %c0_i32_0 = arith.constant 0 : i32
    return %arg0, %c0_i32 : i32, i32
  }
}

</mosaic_0001>

<llo_original>
// kernel: branch_1_fun.1
$region0: #{branch_1_fun.1}
  #allocation0 [shape = 'u32[]', space=smem, size = 0x4, offset = 0x4, fixed_abs, tag = 'smem constant byte address 0x4 - core index']
  #allocation1 [shape = 'u32[144,128]{1,0:T(1,128)}', space=vmem, size = 0x12000, scoped, tag = 'internal scratch']
  %s0 = inlined_call_operand.vmem [shape: f32[2,1024], index: 0, kind: input, shape index: {}]
  %s1 = inlined_call_operand.vmem [shape: f32[2,1024], index: 1, kind: output, shape index: {}]
  %s2 = sld [smem:[#allocation0]]
  $region14: #{branch_1_fun.1} parent=0
    _
  %s4 = ssub.s32 1, %s2
  %s5 = scalar_select 0, %s4, %s2
  // Predicated region
  $region2: #{branch_1_fun.1} parent=0 // pred_check
    _
  $region3: #{branch_1_fun.1} parent=0 // pred_check_branch
    %7 = sbr.rel (0) target = $region5
  $region4: #{branch_1_fun.1} parent=0 // pred_region
    _
  $region5: #{branch_1_fun.1} parent=0 // pred_fallthru
    _
  %v8 = vld [vmem:[%s0] sm:$0xff]
  %v9 = vld [vmem:[%s0 + $0x8] sm:$0xff]
  %v10 = vmul.f32 %v8, 2.0
  %v11 = vmul.f32 %v9, 2.0
  %v12 = vadd.f32 %v10, 1.0
  %v13 = vadd.f32 %v11, 1.0
  %14 = vst [vmem:[%s1] sm:$0xff] %v12
  %15 = vst [vmem:[%s1 + $0x8] sm:$0xff] %v13
  // Predicated region
  $region6: #{branch_1_fun.1} parent=0 // pred_check
    _
  $region7: #{branch_1_fun.1} parent=0 // pred_check_branch
    %17 = sbr.rel (0) target = $region9
  $region8: #{branch_1_fun.1} parent=0 // pred_region
    _
  $region9: #{branch_1_fun.1} parent=0 // pred_fallthru
    _
  // Predicated region
  $region10: #{branch_1_fun.1} parent=0 // pred_check
    _
  $region11: #{branch_1_fun.1} parent=0 // pred_check_branch
    %19 = sbr.rel (0) target = $region13
  $region12: #{branch_1_fun.1} parent=0 // pred_region
    _
  $region13: #{branch_1_fun.1} parent=0 // pred_fallthru
    _

</llo_original>
